<compile_context>
chip_gen: v7x
topology: tpu7x:2x2x1
jax: 0.10.0
libtpu: 0.0.40
codegen_flags: <defaults>
</compile_context>

<pallas_src>
import functools

import jax
import jax.numpy as jnp
from jax.experimental import pallas as pl
from jax.experimental.pallas import tpu as pltpu

_HIDDEN = 128
_LANE = 128
_SUBLANE = 8
_NEG_BIG = -1e30  # effectively -inf for f32 softmax masking (via padded bias)


def _round_up(x, m):
    return ((x + m - 1) // m) * m


def _pick_batch_tile(B):
    """Rows per grid step.

    Tiny batches: one sublane-rounded step.  Medium batches: split in two so a
    v7x chip's second TensorCore gets a grid step.  Large batches: 1024-row
    tiles (MXU-friendly multiple of 256, amortizes per-step overhead, and
    still only ~2-3 MiB of double-buffered VMEM).
    """
    if B <= 16:
        return _round_up(max(B, 1), _SUBLANE)
    if B >= 2048:
        return 1024
    return min(1024, _round_up(-(-B // 2), _SUBLANE))


def _mlp_softmax_kernel(x_ref, w1_ref, b1_ref, w2_ref, b2_ref, w3_ref, b3_ref,
                        o_ref):
    """Fused 3-layer MLP + softmax on one (TB, ...) batch tile.

    Weights are bf16 (MXU-native); activations are cast to bf16 in VMEM at
    each MXU input; every dot accumulates in f32 and all elementwise math
    (bias, relu, softmax) stays in f32.  Padded action lanes carry a -1e30
    bias (and zero weight columns), so no explicit masking is needed.
    """
    x = x_ref[...].astype(jnp.bfloat16)  # f32 tile -> bf16 MXU input, in VMEM

    # linear1 + relu
    h1 = jnp.dot(x, w1_ref[...], preferred_element_type=jnp.float32)
    h1 = jnp.maximum(h1 + b1_ref[...], 0.0)

    # linear2 + relu
    h2 = jnp.dot(h1.astype(jnp.bfloat16), w2_ref[...],
                 preferred_element_type=jnp.float32)
    h2 = jnp.maximum(h2 + b2_ref[...], 0.0)

    # linear3 (lane-dense padded logits slab); padded lanes -> ~-1e30
    logits = jnp.dot(h2.astype(jnp.bfloat16), w3_ref[...],
                     preferred_element_type=jnp.float32)
    logits = logits + b3_ref[...]

    # Numerically-stable softmax over the action (lane) axis.
    m = jnp.max(logits, axis=-1, keepdims=True)
    e = jnp.exp(logits - m)
    denom = jnp.sum(e, axis=-1, keepdims=True)
    o_ref[...] = (e * pl.reciprocal(denom, approx=True)).astype(o_ref.dtype)


def _resident_spec(shape):
    # Whole-array block with a constant index_map: stays VMEM-resident across
    # all grid steps (no re-DMA).
    return pl.BlockSpec(shape, lambda i: (0,) * len(shape))


@functools.partial(jax.jit, static_argnames=("batch_mode",))
def actor_forward(state, params, batch_mode=False):
    """Mirrors Actor.forward: optional unsqueeze, flatten, PolicyNet, softmax.

    Returns bf16 probabilities of shape (B, action_size).
    """
    state = jnp.asarray(state, jnp.float32)
    if not batch_mode:
        state = state[None, ...]
    x = state.reshape(state.shape[0], -1)

    w1, b1 = params["w1"], params["b1"]
    w2, b2 = params["w2"], params["b2"]
    w3, b3 = params["w3"], params["b3"]

    B, S = x.shape
    A = w3.shape[1]
    A_pad = _round_up(max(A, 1), _LANE)

    # Pad layer-3 weight (zeros) and bias (-1e30) to a lane-aligned slab.
    # Zero weight columns + -1e30 bias => padded logits are huge-negative, so
    # the softmax over the padded slab is exact with no in-kernel masking.
    w3p = jnp.pad(w3, ((0, 0), (0, A_pad - A)))
    b3p = jnp.pad(b3, ((0, 0), (0, A_pad - A)), constant_values=_NEG_BIG)

    TB = _pick_batch_tile(B)
    grid = pl.cdiv(B, TB)  # ragged tail handled by padded reads / masked writes

    out = pl.pallas_call(
        _mlp_softmax_kernel,
        out_shape=jax.ShapeDtypeStruct((B, A_pad), jnp.bfloat16),
        grid=(grid,),
        in_specs=[
            pl.BlockSpec((TB, S), lambda i: (i, 0)),        # activations: tiled
            _resident_spec(w1.shape), _resident_spec(b1.shape),
            _resident_spec(w2.shape), _resident_spec(b2.shape),
            _resident_spec(w3p.shape), _resident_spec(b3p.shape),
        ],
        out_specs=pl.BlockSpec((TB, A_pad), lambda i: (i, 0)),
        compiler_params=pltpu.CompilerParams(
            dimension_semantics=("parallel",)),
    )(x, w1, b1, w2, b2, w3p, b3p)

    # Rows are already exact (B); only the padded action lanes are sliced off.
    return out[:, :A]


def init_actor_params(key, state_size, action_size, hidden=_HIDDEN):
    """Deterministic init matching nn.Linear default shapes.

    PyTorch stores W as (out, in); we keep the transposed (in, out) layout so
    the kernel computes x @ W directly.  Weights are stored bf16 (MXU-native,
    halves weight DMA); biases stay f32.  Uniform(-1/sqrt(in), 1/sqrt(in)).
    Note: bf16 weight storage is a (documented) model-level precision change
    vs. an f32 PyTorch Actor.
    """
    ks = jax.random.split(key, 6)

    def lin(kw, kb, fan_in, fan_out):
        bound = 1.0 / jnp.sqrt(jnp.float32(fan_in))
        w = jax.random.uniform(kw, (fan_in, fan_out), jnp.float32, -bound, bound)
        b = jax.random.uniform(kb, (1, fan_out), jnp.float32, -bound, bound)
        return w.astype(jnp.bfloat16), b

    out3 = action_size if action_size > 0 else 1
    w1, b1 = lin(ks[0], ks[1], state_size, hidden)
    w2, b2 = lin(ks[2], ks[3], hidden, hidden)
    w3, b3 = lin(ks[4], ks[5], hidden, out3)
    return {"w1": w1, "b1": b1, "w2": w2, "b2": b2, "w3": w3, "b3": b3}


def _reference_forward(x, params):
    """Pure-JAX f32 reference (params upcast from bf16)."""
    w1 = params["w1"].astype(jnp.float32)
    w2 = params["w2"].astype(jnp.float32)
    w3 = params["w3"].astype(jnp.float32)
    h1 = jnp.maximum(x @ w1 + params["b1"], 0.0)
    h2 = jnp.maximum(h1 @ w2 + params["b2"], 0.0)
    logits = h2 @ w3 + params["b3"]
    return jax.nn.softmax(logits, axis=-1)


if __name__ == "__main__":
    key = jax.random.PRNGKey(0)
    k_param, k_state, k_state2 = jax.random.split(key, 3)

    state_size = 16
    action_size = 8
    batch = 4

    params = init_actor_params(k_param, state_size, action_size)

    # Batched-mode input: (batch, state_size)
    state_batch = jax.random.normal(k_state, (batch, state_size), jnp.float32)
    out_batch = actor_forward(state_batch, params, batch_mode=True)
    out_batch = jax.block_until_ready(out_batch)

    # Single-observation mode: (state_size,) -> unsqueezed to (1, state_size)
    out_single = actor_forward(state_batch[0], params, batch_mode=False)
    out_single = jax.block_until_ready(out_single)

    # Larger ragged batch: exercises the multi-step grid + ragged tail path.
    batch2 = 20
    state_big = jax.random.normal(k_state2, (batch2, state_size), jnp.float32)
    out_big = actor_forward(state_big, params, batch_mode=True)
    out_big = jax.block_until_ready(out_big)

    # Check against a pure-JAX f32 reference (bf16 MXU inputs, bf16 output
    # store and approx reciprocal => loosened tolerance).
    ref_batch = _reference_forward(state_batch.reshape(batch, -1), params)
    ref_big = _reference_forward(state_big.reshape(batch2, -1), params)

    assert out_batch.shape == (batch, action_size)
    assert out_single.shape == (1, action_size)
    assert out_big.shape == (batch2, action_size)

    assert jnp.allclose(out_batch.astype(jnp.float32), ref_batch,
                        atol=2e-2, rtol=2e-2)
    assert jnp.allclose(out_single.astype(jnp.float32), ref_batch[:1],
                        atol=2e-2, rtol=2e-2)
    assert jnp.allclose(out_big.astype(jnp.float32), ref_big,
                        atol=2e-2, rtol=2e-2)
    # Rows approximately normalized (bf16 store + approx reciprocal).
    assert jnp.allclose(jnp.sum(out_batch.astype(jnp.float32), axis=-1),
                        1.0, atol=1e-2)
    assert jnp.allclose(jnp.sum(out_big.astype(jnp.float32), axis=-1),
                        1.0, atol=1e-2)

    print("KERNEL_OK")
</pallas_src>

<mosaic_0001>
module attributes {stable_mosaic.version = 11 : i64} {
  func.func @_mlp_softmax_kernel(%arg0: i32, %arg1: memref<8x16xf32, #tpu.memory_space<vmem>>, %arg2: memref<16x128xbf16, #tpu.memory_space<vmem>>, %arg3: memref<1x128xf32, #tpu.memory_space<vmem>>, %arg4: memref<128x128xbf16, #tpu.memory_space<vmem>>, %arg5: memref<1x128xf32, #tpu.memory_space<vmem>>, %arg6: memref<128x128xbf16, #tpu.memory_space<vmem>>, %arg7: memref<1x128xf32, #tpu.memory_space<vmem>>, %arg8: memref<8x128xbf16, #tpu.memory_space<vmem>>) attributes {dimension_semantics = [#tpu.dimension_semantics<parallel>], iteration_bounds = array<i64: 1>, scalar_prefetch = 0 : i64, scratch_operands = 0 : i64, tpu.core_type = #tpu.core_type<tc>, window_params = [{transform_indices = @transform_0, window_bounds = array<i64: 8, 16>}, {pipeline_mode = #tpu.pipeline_mode<synchronous>, transform_indices = @transform_1, window_bounds = array<i64: 16, 128>}, {pipeline_mode = #tpu.pipeline_mode<synchronous>, transform_indices = @transform_2, window_bounds = array<i64: 1, 128>}, {pipeline_mode = #tpu.pipeline_mode<synchronous>, transform_indices = @transform_3, window_bounds = array<i64: 128, 128>}, {pipeline_mode = #tpu.pipeline_mode<synchronous>, transform_indices = @transform_4, window_bounds = array<i64: 1, 128>}, {pipeline_mode = #tpu.pipeline_mode<synchronous>, transform_indices = @transform_5, window_bounds = array<i64: 128, 128>}, {pipeline_mode = #tpu.pipeline_mode<synchronous>, transform_indices = @transform_6, window_bounds = array<i64: 1, 128>}, {transform_indices = @transform_7, window_bounds = array<i64: 8, 128>}]} {
    %c0 = arith.constant 0 : index
    %c0_0 = arith.constant 0 : index
    %0 = vector.load %arg1[%c0, %c0_0] : memref<8x16xf32, #tpu.memory_space<vmem>>, vector<8x16xf32>
    %1 = arith.truncf %0 : vector<8x16xf32> to vector<8x16xbf16>
    %c0_1 = arith.constant 0 : index
    %c0_2 = arith.constant 0 : index
    %2 = vector.load %arg2[%c0_1, %c0_2] : memref<16x128xbf16, #tpu.memory_space<vmem>>, vector<16x128xbf16>
    %cst = arith.constant dense<0.000000e+00> : vector<8x128xf32>
    %3 = tpu.matmul %1, %2, %cst {dimension_numbers = #tpu.dot_dimension_numbers<[1], [0], [0], [1], [0, 0, 1, 1], [], []>} : vector<8x16xbf16>, vector<16x128xbf16>, vector<8x128xf32> -> vector<8x128xf32>
    %c0_3 = arith.constant 0 : index
    %c0_4 = arith.constant 0 : index
    %4 = vector.load %arg3[%c0_3, %c0_4] : memref<1x128xf32, #tpu.memory_space<vmem>>, vector<1x128xf32>
    %5 = vector.broadcast %4 : vector<1x128xf32> to vector<8x128xf32>
    %6 = arith.addf %3, %5 : vector<8x128xf32>
    %cst_5 = arith.constant 0.000000e+00 : f32
    %7 = vector.broadcast %cst_5 : f32 to vector<8x128xf32>
    %8 = arith.maximumf %6, %7 : vector<8x128xf32>
    %9 = arith.truncf %8 : vector<8x128xf32> to vector<8x128xbf16>
    %c0_6 = arith.constant 0 : index
    %c0_7 = arith.constant 0 : index
    %10 = vector.load %arg4[%c0_6, %c0_7] : memref<128x128xbf16, #tpu.memory_space<vmem>>, vector<128x128xbf16>
    %cst_8 = arith.constant dense<0.000000e+00> : vector<8x128xf32>
    %11 = tpu.matmul %9, %10, %cst_8 {dimension_numbers = #tpu.dot_dimension_numbers<[1], [0], [0], [1], [0, 0, 1, 1], [], []>} : vector<8x128xbf16>, vector<128x128xbf16>, vector<8x128xf32> -> vector<8x128xf32>
    %c0_9 = arith.constant 0 : index
    %c0_10 = arith.constant 0 : index
    %12 = vector.load %arg5[%c0_9, %c0_10] : memref<1x128xf32, #tpu.memory_space<vmem>>, vector<1x128xf32>
    %13 = vector.broadcast %12 : vector<1x128xf32> to vector<8x128xf32>
    %14 = arith.addf %11, %13 : vector<8x128xf32>
    %cst_11 = arith.constant 0.000000e+00 : f32
    %15 = vector.broadcast %cst_11 : f32 to vector<8x128xf32>
    %16 = arith.maximumf %14, %15 : vector<8x128xf32>
    %17 = arith.truncf %16 : vector<8x128xf32> to vector<8x128xbf16>
    %c0_12 = arith.constant 0 : index
    %c0_13 = arith.constant 0 : index
    %18 = vector.load %arg6[%c0_12, %c0_13] : memref<128x128xbf16, #tpu.memory_space<vmem>>, vector<128x128xbf16>
    %cst_14 = arith.constant dense<0.000000e+00> : vector<8x128xf32>
    %19 = tpu.matmul %17, %18, %cst_14 {dimension_numbers = #tpu.dot_dimension_numbers<[1], [0], [0], [1], [0, 0, 1, 1], [], []>} : vector<8x128xbf16>, vector<128x128xbf16>, vector<8x128xf32> -> vector<8x128xf32>
    %c0_15 = arith.constant 0 : index
    %c0_16 = arith.constant 0 : index
    %20 = vector.load %arg7[%c0_15, %c0_16] : memref<1x128xf32, #tpu.memory_space<vmem>>, vector<1x128xf32>
    %21 = vector.broadcast %20 : vector<1x128xf32> to vector<8x128xf32>
    %22 = arith.addf %19, %21 : vector<8x128xf32>
    %cst_17 = arith.constant dense<0xFF800000> : vector<8xf32>
    %23 = vector.multi_reduction <maximumf>, %22, %cst_17 [1] : vector<8x128xf32> to vector<8xf32>
    %24 = vector.shape_cast %23 : vector<8xf32> to vector<8x1xf32>
    %25 = vector.broadcast %24 : vector<8x1xf32> to vector<8x128xf32>
    %26 = arith.subf %22, %25 : vector<8x128xf32>
    %27 = math.exp %26 : vector<8x128xf32>
    %cst_18 = arith.constant dense<0.000000e+00> : vector<8xf32>
    %28 = vector.multi_reduction <add>, %27, %cst_18 [1] : vector<8x128xf32> to vector<8xf32>
    %29 = vector.shape_cast %28 : vector<8xf32> to vector<8x1xf32>
    %30 = tpu.reciprocal %29 {approx = true} : vector<8x1xf32> -> vector<8x1xf32>
    %31 = vector.broadcast %30 : vector<8x1xf32> to vector<8x128xf32>
    %32 = arith.mulf %27, %31 : vector<8x128xf32>
    %33 = arith.truncf %32 : vector<8x128xf32> to vector<8x128xbf16>
    %c0_19 = arith.constant 0 : index
    %c0_20 = arith.constant 0 : index
    %34 = vector.load %arg8[%c0_19, %c0_20] : memref<8x128xbf16, #tpu.memory_space<vmem>>, vector<8x128xbf16>
    tpu.vector_store %arg8[%c0_19, %c0_20], %33 {strides = array<i32>} : memref<8x128xbf16, #tpu.memory_space<vmem>>, vector<8x128xbf16>,
    return
  }
  func.func @transform_0(%arg0: i32) -> (i32, i32) {
    %c0_i32 = arith.constant 0 : i32
    %c0_i32_0 = arith.constant 0 : i32
    return %arg0, %c0_i32 : i32, i32
  }
  func.func @transform_1(%arg0: i32) -> (i32, i32) {
    %c0_i32 = arith.constant 0 : i32
    %c0_i32_0 = arith.constant 0 : i32
    %c0_i32_1 = arith.constant 0 : i32
    return %c0_i32, %c0_i32_0 : i32, i32
  }
  func.func @transform_2(%arg0: i32) -> (i32, i32) {
    %c0_i32 = arith.constant 0 : i32
    %c0_i32_0 = arith.constant 0 : i32
    %c0_i32_1 = arith.constant 0 : i32
    return %c0_i32, %c0_i32_0 : i32, i32
  }
  func.func @transform_3(%arg0: i32) -> (i32, i32) {
    %c0_i32 = arith.constant 0 : i32
    %c0_i32_0 = arith.constant 0 : i32
    %c0_i32_1 = arith.constant 0 : i32
    return %c0_i32, %c0_i32_0 : i32, i32
  }
  func.func @transform_4(%arg0: i32) -> (i32, i32) {
    %c0_i32 = arith.constant 0 : i32
    %c0_i32_0 = arith.constant 0 : i32
    %c0_i32_1 = arith.constant 0 : i32
    return %c0_i32, %c0_i32_0 : i32, i32
  }
  func.func @transform_5(%arg0: i32) -> (i32, i32) {
    %c0_i32 = arith.constant 0 : i32
    %c0_i32_0 = arith.constant 0 : i32
    %c0_i32_1 = arith.constant 0 : i32
    return %c0_i32, %c0_i32_0 : i32, i32
  }
  func.func @transform_6(%arg0: i32) -> (i32, i32) {
    %c0_i32 = arith.constant 0 : i32
    %c0_i32_0 = arith.constant 0 : i32
    %c0_i32_1 = arith.constant 0 : i32
    return %c0_i32, %c0_i32_0 : i32, i32
  }
  func.func @transform_7(%arg0: i32) -> (i32, i32) {
    %c0_i32 = arith.constant 0 : i32
    %c0_i32_0 = arith.constant 0 : i32
    return %arg0, %c0_i32 : i32, i32
  }
}

</mosaic_0001>

<llo_original>
// kernel: actor_forward.1
$region0: #{actor_forward.1}
  #allocation0 [shape = 'u32[]', space=smem, size = 0x4, offset = 0x4, fixed_abs, tag = 'smem constant byte address 0x4 - core index']
  #allocation1 [shape = 'u32[144,128]{1,0:T(1,128)}', space=vmem, size = 0x12000, scoped, tag = 'internal scratch']
  %s0 = inlined_call_operand.vmem [shape: f32[4,16], index: 0, kind: input, shape index: {}]
  %s1 = inlined_call_operand.vmem [shape: bf16[16,128], index: 1, kind: input, shape index: {}]
  %s2 = inlined_call_operand.vmem [shape: f32[1,128], index: 2, kind: input, shape index: {}]
  %s3 = inlined_call_operand.vmem [shape: bf16[128,128], index: 3, kind: input, shape index: {}]
  %s4 = inlined_call_operand.vmem [shape: f32[1,128], index: 4, kind: input, shape index: {}]
  %s5 = inlined_call_operand.vmem [shape: bf16[128,128], index: 5, kind: input, shape index: {}]
  %s6 = inlined_call_operand.vmem [shape: f32[1,128], index: 6, kind: input, shape index: {}]
  %s7 = inlined_call_operand.hbm [shape: bf16[4,128], index: 7, kind: output, shape index: {}]
  %s8 = sld [smem:[#allocation0]]
  $region38: #{actor_forward.1} parent=0
    _
  %s10 = ssub.s32 1, %s8
  %s11 = scalar_select 0, %s10, %s8
  $region1: #{actor_forward.1} parent=0
    #allocation2 [shape = 'u8[2048]{0}', space=vmem, size = 0x800, scoped, tag = 'output window, operand 0, single buffered']
    #allocation3 [shape = 's32[1]{0}', space=sflag, size = 0x4, scoped, tag = 'scoped memory for actor_forward.1']
    %12 = vsyncpa [#allocation3], 0
    // Predicated region
    $region2: #{actor_forward.1} parent=1 // pred_check
      _
    $region3: #{actor_forward.1} parent=1 // pred_check_branch
      %14 = sbr.rel (0) target = $region5
    $region4: #{actor_forward.1} parent=1 // pred_region
      _
    $region5: #{actor_forward.1} parent=1 // pred_fallthru
      _
    // Predicated region
    $region6: #{actor_forward.1} parent=1 // pred_check
      _
    $region7: #{actor_forward.1} parent=1 // pred_check_branch
      %16 = sbr.rel (0) target = $region9
    $region8: #{actor_forward.1} parent=1 // pred_region
      _
    $region9: #{actor_forward.1} parent=1 // pred_fallthru
      _
    // Predicated region
    $region10: #{actor_forward.1} parent=1 // pred_check
      _
    $region11: #{actor_forward.1} parent=1 // pred_check_branch
      %18 = sbr.rel (0) target = $region13
    $region12: #{actor_forward.1} parent=1 // pred_region
      _
    $region13: #{actor_forward.1} parent=1 // pred_fallthru
      _
    // Predicated region
    $region14: #{actor_forward.1} parent=1 // pred_check
      _
    $region15: #{actor_forward.1} parent=1 // pred_check_branch
      %20 = sbr.rel (0) target = $region17
    $region16: #{actor_forward.1} parent=1 // pred_region
      _
    $region17: #{actor_forward.1} parent=1 // pred_fallthru
      _
    // Predicated region
    $region18: #{actor_forward.1} parent=1 // pred_check
      _
    $region19: #{actor_forward.1} parent=1 // pred_check_branch
      %22 = sbr.rel (0) target = $region21
    $region20: #{actor_forward.1} parent=1 // pred_region
      _
    $region21: #{actor_forward.1} parent=1 // pred_fallthru
      _
    // Predicated region
    $region22: #{actor_forward.1} parent=1 // pred_check
      _
    $region23: #{actor_forward.1} parent=1 // pred_check_branch
      %24 = sbr.rel (0) target = $region25
    $region24: #{actor_forward.1} parent=1 // pred_region
      _
    $region25: #{actor_forward.1} parent=1 // pred_fallthru
      _
    // Predicated region
    $region26: #{actor_forward.1} parent=1 // pred_check
      _
    $region27: #{actor_forward.1} parent=1 // pred_check_branch
      %26 = sbr.rel (0) target = $region29
    $region28: #{actor_forward.1} parent=1 // pred_region
      _
    $region29: #{actor_forward.1} parent=1 // pred_fallthru
      _
    %v28 = vld [vmem:[%s0] sm:$0xff]
    %v29 = vpack.c.bf16 %v28, %v28
    %v30 = vld [vmem:[%s1] sm:$0xf]
    %v31 = vld [vmem:[%s1 + $0x4] sm:$0xf]
    %v32 = vld [vmem:[%s2] sm:$0x1]
    %v34 = vlaneseq
    %v35 = vshrl.u32 %v34, 7
    %v36 = vsub.s32 0, %v35
    %v37 = vrot.slane %v32, %v36
    %v41 = vunpack.c.l.b16 %v30
    %v42 = vunpack.c.l.b16 %v31
    %v43 = vpack.c.b16 %v42, %v41
    %vm45 = vcmask 130048
    %v47 = vsel %vm45, %v29, 0
    %49 = vmatprep.subr.bf16.mxu0 0
    %50 = vmatpush1.bf16.msra.mxu0 %v43
    %51 = vmatprep.subr.bf16.mxu0 0
    %52 = vmatpush1.bf16.msra.mxu0 0
    %53 = vmatprep.subr.bf16.mxu0 0
    %54 = vmatpush1.bf16.msra.mxu0 0
    %55 = vmatprep.subr.bf16.mxu0 0
    %56 = vmatpush1.bf16.msra.mxu0 0
    %57 = vmatprep.subr.bf16.mxu0 0
    %58 = vmatpush1.bf16.msra.mxu0 0
    %59 = vmatprep.subr.bf16.mxu0 0
    %60 = vmatpush1.bf16.msra.mxu0 0
    %61 = vmatprep.subr.bf16.mxu0 0
    %62 = vmatpush1.bf16.msra.mxu0 0
    %63 = vmatprep.subr.bf16.mxu0 0
    %64 = vmatpush1.bf16.msra.mxu0 0
    %65 = vmatprep.subr.bf16.mxu0 0
    %66 = vmatpush1.bf16.msra.mxu0 0
    %67 = vmatprep.subr.bf16.mxu0 0
    %68 = vmatpush1.bf16.msra.mxu0 0
    %69 = vmatprep.subr.bf16.mxu0 0
    %70 = vmatpush1.bf16.msra.mxu0 0
    %71 = vmatprep.subr.bf16.mxu0 0
    %72 = vmatpush1.bf16.msra.mxu0 0
    %73 = vmatprep.subr.bf16.mxu0 0
    %74 = vmatpush1.bf16.msra.mxu0 0
    %75 = vmatprep.subr.bf16.mxu0 0
    %76 = vmatpush1.bf16.msra.mxu0 0
    %77 = vmatprep.subr.bf16.mxu0 0
    %78 = vmatpush1.bf16.msra.mxu0 0
    %79 = vmatprep.subr.bf16.mxu0 0
    %80 = vmatpush1.bf16.msra.mxu0 0
    %81 = vmatprep.mubr.bf16.mxu0 0
    %82 = vmatmul.mubr.bf16.gmra.mrb[0].mxu0 %v47
    %v83 = vpop.f32.mrb[0].mxu0
    %v84 = vadd.f32 %v37, %v83
    %v85 = vpop.f32.mrb[0].mxu0
    %v86 = vpop.f32.mrb[0].mxu0
    %v87 = vpop.f32.mrb[0].mxu0
    %88 = vdwg.mxu0
    %v89 = vmax.f32 %v84, 0.0
    %v90 = vpack.c.bf16 %v89, %v89
    %v91 = vld [vmem:[%s3] sm:$0xf]
    %v92 = vld [vmem:[%s3 + $0x4] sm:$0xf]
    %v93 = vld [vmem:[%s3 + $0x8] sm:$0xf]
    %v94 = vld [vmem:[%s3 + $0xc] sm:$0xf]
    %v95 = vld [vmem:[%s3 + $0x10] sm:$0xf]
    %v96 = vld [vmem:[%s3 + $0x14] sm:$0xf]
    %v97 = vld [vmem:[%s3 + $0x18] sm:$0xf]
    %v98 = vld [vmem:[%s3 + $0x1c] sm:$0xf]
    %v99 = vld [vmem:[%s3 + $0x20] sm:$0xf]
    %v100 = vld [vmem:[%s3 + $0x24] sm:$0xf]
    %v101 = vld [vmem:[%s3 + $0x28] sm:$0xf]
    %v102 = vld [vmem:[%s3 + $0x2c] sm:$0xf]
    %v103 = vld [vmem:[%s3 + $0x30] sm:$0xf]
    %v104 = vld [vmem:[%s3 + $0x34] sm:$0xf]
    %v105 = vld [vmem:[%s3 + $0x38] sm:$0xf]
    %v106 = vld [vmem:[%s3 + $0x3c] sm:$0xf]
    %v107 = vld [vmem:[%s4] sm:$0x1]
    %v109 = vlaneseq
    %v110 = vshrl.u32 %v109, 7
    %v111 = vsub.s32 0, %v110
    %v112 = vrot.slane %v107, %v111
    %v130 = vunpack.c.l.b16 %v91
    %v131 = vunpack.c.l.b16 %v92
    %v132 = vunpack.c.l.b16 %v93
    %v133 = vunpack.c.l.b16 %v94
    %v134 = vunpack.c.l.b16 %v95
    %v135 = vunpack.c.l.b16 %v96
    %v136 = vunpack.c.l.b16 %v97
    %v137 = vunpack.c.l.b16 %v98
    %v138 = vunpack.c.l.b16 %v99
    %v139 = vunpack.c.l.b16 %v100
    %v140 = vunpack.c.l.b16 %v101
    %v141 = vunpack.c.l.b16 %v102
    %v142 = vunpack.c.l.b16 %v103
    %v143 = vunpack.c.l.b16 %v104
    %v144 = vunpack.c.l.b16 %v105
    %v145 = vunpack.c.l.b16 %v106
    %v146 = vpack.c.b16 %v131, %v130
    %v147 = vpack.c.b16 %v133, %v132
    %v148 = vpack.c.b16 %v135, %v134
    %v149 = vpack.c.b16 %v137, %v136
    %v150 = vpack.c.b16 %v139, %v138
    %v151 = vpack.c.b16 %v141, %v140
    %v152 = vpack.c.b16 %v143, %v142
    %v153 = vpack.c.b16 %v145, %v144
    %162 = vmatprep.subr.bf16.mxu0 0
    %163 = vmatpush1.bf16.msra.mxu0 %v146
    %164 = vmatprep.subr.bf16.mxu0 0
    %165 = vmatpush1.bf16.msra.mxu0 %v147
    %166 = vmatprep.subr.bf16.mxu0 0
    %167 = vmatpush1.bf16.msra.mxu0 %v148
    %168 = vmatprep.subr.bf16.mxu0 0
    %169 = vmatpush1.bf16.msra.mxu0 %v149
    %170 = vmatprep.subr.bf16.mxu0 0
    %171 = vmatpush1.bf16.msra.mxu0 %v150
    %172 = vmatprep.subr.bf16.mxu0 0
    %173 = vmatpush1.bf16.msra.mxu0 %v151
    %174 = vmatprep.subr.bf16.mxu0 0
    %175 = vmatpush1.bf16.msra.mxu0 %v152
    %176 = vmatprep.subr.bf16.mxu0 0
    %177 = vmatpush1.bf16.msra.mxu0 %v153
    %178 = vmatprep.subr.bf16.mxu0 0
    %179 = vmatpush1.bf16.msra.mxu0 0
    %180 = vmatprep.subr.bf16.mxu0 0
    %181 = vmatpush1.bf16.msra.mxu0 0
    %182 = vmatprep.subr.bf16.mxu0 0
    %183 = vmatpush1.bf16.msra.mxu0 0
    %184 = vmatprep.subr.bf16.mxu0 0
    %185 = vmatpush1.bf16.msra.mxu0 0
    %186 = vmatprep.subr.bf16.mxu0 0
    %187 = vmatpush1.bf16.msra.mxu0 0
    %188 = vmatprep.subr.bf16.mxu0 0
    %189 = vmatpush1.bf16.msra.mxu0 0
    %190 = vmatprep.subr.bf16.mxu0 0
    %191 = vmatpush1.bf16.msra.mxu0 0
    %192 = vmatprep.subr.bf16.mxu0 0
    %193 = vmatpush1.bf16.msra.mxu0 0
    %194 = vmatprep.mubr.bf16.mxu0 0
    %195 = vmatmul.mubr.bf16.gmra.mrb[0].mxu0 %v90
    %v196 = vpop.f32.mrb[0].mxu0
    %v197 = vadd.f32 %v112, %v196
    %v198 = vpop.f32.mrb[0].mxu0
    %v199 = vpop.f32.mrb[0].mxu0
    %v200 = vpop.f32.mrb[0].mxu0
    %201 = vdwg.mxu0
    %v202 = vmax.f32 %v197, 0.0
    %v203 = vpack.c.bf16 %v202, %v202
    %v204 = vld [vmem:[%s5] sm:$0xf]
    %v205 = vld [vmem:[%s5 + $0x4] sm:$0xf]
    %v206 = vld [vmem:[%s5 + $0x8] sm:$0xf]
    %v207 = vld [vmem:[%s5 + $0xc] sm:$0xf]
    %v208 = vld [vmem:[%s5 + $0x10] sm:$0xf]
    %v209 = vld [vmem:[%s5 + $0x14] sm:$0xf]
    %v210 = vld [vmem:[%s5 + $0x18] sm:$0xf]
    %v211 = vld [vmem:[%s5 + $0x1c] sm:$0xf]
    %v212 = vld [vmem:[%s5 + $0x20] sm:$0xf]
    %v213 = vld [vmem:[%s5 + $0x24] sm:$0xf]
    %v214 = vld [vmem:[%s5 + $0x28] sm:$0xf]
    %v215 = vld [vmem:[%s5 + $0x2c] sm:$0xf]
    %v216 = vld [vmem:[%s5 + $0x30] sm:$0xf]
    %v217 = vld [vmem:[%s5 + $0x34] sm:$0xf]
    %v218 = vld [vmem:[%s5 + $0x38] sm:$0xf]
    %v219 = vld [vmem:[%s5 + $0x3c] sm:$0xf]
    %v220 = vld [vmem:[%s6] sm:$0x1]
    %v222 = vlaneseq
    %v223 = vshrl.u32 %v222, 7
    %v224 = vsub.s32 0, %v223
    %v225 = vrot.slane %v220, %v224
    %v243 = vunpack.c.l.b16 %v204
    %v244 = vunpack.c.l.b16 %v205
    %v245 = vunpack.c.l.b16 %v206
    %v246 = vunpack.c.l.b16 %v207
    %v247 = vunpack.c.l.b16 %v208
    %v248 = vunpack.c.l.b16 %v209
    %v249 = vunpack.c.l.b16 %v210
    %v250 = vunpack.c.l.b16 %v211
    %v251 = vunpack.c.l.b16 %v212
    %v252 = vunpack.c.l.b16 %v213
    %v253 = vunpack.c.l.b16 %v214
    %v254 = vunpack.c.l.b16 %v215
    %v255 = vunpack.c.l.b16 %v216
    %v256 = vunpack.c.l.b16 %v217
    %v257 = vunpack.c.l.b16 %v218
    %v258 = vunpack.c.l.b16 %v219
    %v259 = vpack.c.b16 %v244, %v243
    %v260 = vpack.c.b16 %v246, %v245
    %v261 = vpack.c.b16 %v248, %v247
    %v262 = vpack.c.b16 %v250, %v249
    %v263 = vpack.c.b16 %v252, %v251
    %v264 = vpack.c.b16 %v254, %v253
    %v265 = vpack.c.b16 %v256, %v255
    %v266 = vpack.c.b16 %v258, %v257
    %275 = vmatprep.subr.bf16.mxu0 0
    %276 = vmatpush1.bf16.msra.mxu0 %v259
    %277 = vmatprep.subr.bf16.mxu0 0
    %278 = vmatpush1.bf16.msra.mxu0 %v260
    %279 = vmatprep.subr.bf16.mxu0 0
    %280 = vmatpush1.bf16.msra.mxu0 %v261
    %281 = vmatprep.subr.bf16.mxu0 0
    %282 = vmatpush1.bf16.msra.mxu0 %v262
    %283 = vmatprep.subr.bf16.mxu0 0
    %284 = vmatpush1.bf16.msra.mxu0 %v263
    %285 = vmatprep.subr.bf16.mxu0 0
    %286 = vmatpush1.bf16.msra.mxu0 %v264
    %287 = vmatprep.subr.bf16.mxu0 0
    %288 = vmatpush1.bf16.msra.mxu0 %v265
    %289 = vmatprep.subr.bf16.mxu0 0
    %290 = vmatpush1.bf16.msra.mxu0 %v266
    %291 = vmatprep.subr.bf16.mxu0 0
    %292 = vmatpush1.bf16.msra.mxu0 0
    %293 = vmatprep.subr.bf16.mxu0 0
    %294 = vmatpush1.bf16.msra.mxu0 0
    %295 = vmatprep.subr.bf16.mxu0 0
    %296 = vmatpush1.bf16.msra.mxu0 0
    %297 = vmatprep.subr.bf16.mxu0 0
    %298 = vmatpush1.bf16.msra.mxu0 0
    %299 = vmatprep.subr.bf16.mxu0 0
    %300 = vmatpush1.bf16.msra.mxu0 0
    %301 = vmatprep.subr.bf16.mxu0 0
    %302 = vmatpush1.bf16.msra.mxu0 0
    %303 = vmatprep.subr.bf16.mxu0 0
    %304 = vmatpush1.bf16.msra.mxu0 0
    %305 = vmatprep.subr.bf16.mxu0 0
    %306 = vmatpush1.bf16.msra.mxu0 0
    %307 = vmatprep.mubr.bf16.mxu0 0
    %308 = vmatmul.mubr.bf16.gmra.mrb[0].mxu0 %v203
    %v309 = vpop.f32.mrb[0].mxu0
    %v310 = vadd.f32 %v225, %v309
    %v311 = vpop.f32.mrb[0].mxu0
    %v312 = vpop.f32.mrb[0].mxu0
    %v313 = vpop.f32.mrb[0].mxu0
    %314 = vdwg.mxu0
    %315 = vmax.xlane.f32.xlu0 %v310
    %v316 = vpop.xlane.xlu0 %315
    %v317 = vsub.f32 %v310, %v316
    %v318 = vmul.f32 %v317, 1.442695
    %v319 = vpow.pop %v318
    %320 = vadd.xlane.f32.xlu0 %v319
    %v321 = vpop.xlane.xlu0 %320
    %v322 = vrcp.pop %v321
    %v323 = vmul.f32 %v319, %v322
    %v324 = vpack.c.bf16 %v323, %v323
    %v327 = vunpack.c.l.s4 1983009808
    %v328 = vunpack.c.0.s8 %v327
    %v329 = vlaneseq
    %v330 = vshrl.u32 %v329, 7
    %v331 = vsub.s32 %v328, %v330
    %v332 = vrot.slane %v324, %v331
    %v333 = vcombine.high %v332, %v332
    %336 = vst [vmem:[#allocation2] sm:$0x3] %v332
    %337 = vst [vmem:[#allocation2 + $0x2] sm:$0x3] %v333
    // Predicated region
    $region30: #{actor_forward.1} parent=1 // pred_check
      _
    $region31: #{actor_forward.1} parent=1 // pred_check_branch
      %339 = sbr.rel (0) target = $region33
    $region32: #{actor_forward.1} parent=1 // pred_region
      %s341 = ssub.s32 64, 32
      %342 = vsyncadd [#allocation3], %s341
      %s343 = sshll.u32 [#allocation2], 4
      %s344 = int_to_ptr.vmem [resolvable:$true] %s343
      %349 = dma.vmem_to_hbm [thread:$0]  %s344, 32, %s7, [#allocation3], 32, 32, 2
    $region33: #{actor_forward.1} parent=1 // pred_fallthru
      _
    // Predicated region
    $region34: #{actor_forward.1} parent=1 // pred_check
      _
    $region35: #{actor_forward.1} parent=1 // pred_check_branch
      %351 = sbr.rel (0) target = $region37
    $region36: #{actor_forward.1} parent=1 // pred_region
      %352 = dma.done [#allocation3], 64
    $region37: #{actor_forward.1} parent=1 // pred_fallthru
      _
    %353 = vsyncpa [#allocation3], 1

</llo_original>
